<compile_context>
chip_gen: v6e
topology: v6e:2x2x1
jax: 0.10.0
libtpu: 0.0.40
codegen_flags: <defaults>
</compile_context>

<pallas_src>
import functools
import math

import jax
import jax.numpy as jnp
from jax.experimental import pallas as pl
from jax.experimental.pallas import tpu as pltpu

_LANE = 128
_DEFAULT_BLOCK_BYTES = 2 * 1024 * 1024   # ~2 MB per live buffer (v5e-safe;
                                         # pass 4 MB on v7x for extra BW)


def _round_up(n, m):
    return ((n + m - 1) // m) * m


def _sublane(dtype):
    # f32 -> 8, bf16 -> 16, int8/fp8 -> 32 (narrow dtypes pack along sublanes).
    return max(8, 32 // jnp.dtype(dtype).itemsize)


def _vmem_limit_bytes(block_bytes, block_elems, training):
    # x / pe / out, each double-buffered, plus PRNG-bits & mask temporaries
    # (one u32 + one f32 tile) when training, plus margin.
    need = 6 * block_bytes + (8 * block_elems if training else 0) + (2 << 20)
    return int(min(max(need, 32 << 20), 64 << 20))


def _pe_kernel(seed_ref, x_ref, pe_ref, o_ref, *, p, training, grid_ndims):
    """One block: out = dropout(x + pe) with inverted-dropout scaling.

    pe_ref broadcasts against x_ref (same shape in the natural path, a single
    (1, lanes) slab shared by every batch row in the lane-dense path)."""
    y = x_ref[...] + pe_ref[...]          # same dtype -> pure VPU add

    if training and p > 0.0:
        # Re-seed per grid block so the mask never repeats across tiles/batches.
        block_id = pl.program_id(0)
        for ax in range(1, grid_ndims):
            block_id = block_id * pl.num_programs(ax) + pl.program_id(ax)
        pltpu.prng_seed(seed_ref[0], block_id)
        bits = pltpu.prng_random_bits(y.shape)
        if bits.dtype != jnp.uint32:
            bits = pltpu.bitcast(bits, jnp.uint32)
        threshold = jnp.uint32(min(int(round(p * 4294967296.0)), 4294967295))
        keep = bits >= threshold                       # P(keep) = 1 - p
        y = jnp.where(keep, y * (1.0 / (1.0 - p)), jnp.zeros_like(y))

    o_ref[...] = y


def make_positional_encoding(d_model, max_len=5000, dtype=jnp.float32):
    """Builds the (1, max_len, d_model) sinusoidal PE table once, at `dtype`
    (cast hoisted out of the forward path)."""
    position = jnp.arange(max_len, dtype=jnp.float32)[:, None]
    div_term = jnp.exp(
        jnp.arange(0, d_model, 2, dtype=jnp.float32)
        * -(math.log(10000.0) / d_model)
    )
    pe = jnp.zeros((max_len, d_model), dtype=jnp.float32)
    pe = pe.at[:, 0::2].set(jnp.sin(position * div_term))
    pe = pe.at[:, 1::2].set(jnp.cos(position * div_term))
    return pe[None].astype(dtype)


def positional_encoding_forward(x, pe, seed, *, p=0.1, training=False,
                                target_block_bytes=_DEFAULT_BLOCK_BYTES):
    """Forward of PositionalEncoding: dropout(x + pe[:, :S, :]).

    x: (B, S, D); pe: (1, max_len, D); seed: (1,) int32 (training dropout)."""
    B, S, D = x.shape
    assert S <= pe.shape[1], "sequence length exceeds PE max_len"
    assert D == pe.shape[2], "d_model mismatch between x and PE table"
    dtype = x.dtype
    itemsize = jnp.dtype(dtype).itemsize
    sub = _sublane(dtype)

    if pe.dtype != dtype:
        # Cast only the rows this call consumes, never the whole max_len table.
        pe = pe[:, :S, :].astype(dtype)

    cost = pl.CostEstimate(flops=B * S * D, transcendentals=0,
                           bytes_accessed=(2 * B * S * D + S * D) * itemsize)

    if D % _LANE == 0:
        # ---- Natural layout: tile the sequence dim, batch innermost. --------
        target_rows = _round_up(max(sub, target_block_bytes // (D * itemsize)),
                                sub)
        if S <= target_rows:
            tile_rows = S                    # single, full-extent row tile
            # A block dim that is not a sublane multiple must equal the array
            # dim -> pre-slice the (tiny) PE window only in that case.
            pe_in = pe if (pe.shape[1] == S or S % sub == 0) else pe[:, :S, :]
        else:
            tile_rows = target_rows          # sublane multiple; last tile is
            pe_in = pe                       # partial (handled by Pallas)
        grid = (pl.cdiv(S, tile_rows), B)    # batch innermost -> PE DMA reused
        blk_elems = tile_rows * D
        kernel = functools.partial(_pe_kernel, p=float(p),
                                   training=bool(training), grid_ndims=2)
        return pl.pallas_call(
            kernel,
            out_shape=jax.ShapeDtypeStruct((B, S, D), dtype),
            grid_spec=pltpu.PrefetchScalarGridSpec(
                num_scalar_prefetch=1,                          # seed -> SMEM
                grid=grid,
                in_specs=[
                    pl.BlockSpec((1, tile_rows, D), lambda r, b, s: (b, r, 0)),
                    pl.BlockSpec((1, tile_rows, D), lambda r, b, s: (0, r, 0)),
                ],
                out_specs=pl.BlockSpec((1, tile_rows, D),
                                       lambda r, b, s: (b, r, 0)),
            ),
            compiler_params=pltpu.CompilerParams(
                dimension_semantics=("parallel", "parallel"),
                vmem_limit_bytes=_vmem_limit_bytes(blk_elems * itemsize,
                                                   blk_elems, training)),
            cost_estimate=cost,
        )(seed, x, pe_in)

    # ---- Lane-dense path (D % 128 != 0): flat (B, S*D) slabs. ---------------
    n = S * D
    x_flat = x.reshape(B, n)                                  # bitcast, no copy
    pe_flat = (pe if pe.shape[1] == S else pe[:, :S, :]).reshape(1, n)
    rows_v = _round_up(B, sub)               # sublane-padded batch rows in VMEM
    target_lanes = max(_LANE,
                       (target_block_bytes // (rows_v * itemsize))
                       // _LANE * _LANE)
    tile_n = n if n <= target_lanes else target_lanes
    grid = (pl.cdiv(n, tile_n),)
    blk_elems = rows_v * tile_n
    kernel = functools.partial(_pe_kernel, p=float(p),
                               training=bool(training), grid_ndims=1)
    out = pl.pallas_call(
        kernel,
        out_shape=jax.ShapeDtypeStruct((B, n), dtype),
        grid_spec=pltpu.PrefetchScalarGridSpec(
            num_scalar_prefetch=1,
            grid=grid,
            in_specs=[
                pl.BlockSpec((B, tile_n), lambda t, s: (0, t)),   # x slab
                pl.BlockSpec((1, tile_n), lambda t, s: (0, t)),   # PE slab
            ],
            out_specs=pl.BlockSpec((B, tile_n), lambda t, s: (0, t)),
        ),
        compiler_params=pltpu.CompilerParams(
            dimension_semantics=("parallel",),
            vmem_limit_bytes=_vmem_limit_bytes(blk_elems * itemsize,
                                               blk_elems, training)),
        cost_estimate=cost,
    )(seed, x_flat, pe_flat)
    return out.reshape(B, S, D)


if __name__ == "__main__":
    dropout_p = 0.1
    seed = jnp.array([0], dtype=jnp.int32)
    keys = jax.random.split(jax.random.PRNGKey(0), 4)

    # 1) Small d_model (< 128): lane-dense flattened path, single full tile.
    B, S, D = 2, 8, 32
    x = jax.random.normal(keys[0], (B, S, D), dtype=jnp.float32)
    pe = make_positional_encoding(D, max_len=5000, dtype=x.dtype)
    out = jax.block_until_ready(
        positional_encoding_forward(x, pe, seed, p=dropout_p, training=False))
    ref = x + pe[:, :S, :]
    assert out.shape == (B, S, D)
    assert jnp.allclose(out, ref, atol=1e-6), "mismatch (lane-dense)"

    # 2) d_model multiple of 128: natural layout, PE read from the full table.
    B2, S2, D2 = 2, 8, 128
    x2 = jax.random.normal(keys[1], (B2, S2, D2), dtype=jnp.float32)
    pe2 = make_positional_encoding(D2, max_len=5000, dtype=x2.dtype)
    out2 = jax.block_until_ready(
        positional_encoding_forward(x2, pe2, seed, p=dropout_p, training=False))
    assert jnp.allclose(out2, x2 + pe2[:, :S2, :], atol=1e-6), "mismatch (natural)"

    # 3) Natural path with multiple row tiles and a partial (ragged) last tile.
    B3, S3 = 2, 100
    x3 = jax.random.normal(keys[2], (B3, S3, D2), dtype=jnp.float32)
    out3 = jax.block_until_ready(
        positional_encoding_forward(x3, pe2, seed, p=dropout_p, training=False,
                                    target_block_bytes=16 * 1024))
    assert jnp.allclose(out3, x3 + pe2[:, :S3, :], atol=1e-6), "mismatch (ragged rows)"

    # 4) Lane-dense path with multiple lane tiles and a partial last tile.
    B4, S4, D4 = 2, 10, 24
    x4 = jax.random.normal(keys[3], (B4, S4, D4), dtype=jnp.float32)
    pe4 = make_positional_encoding(D4, max_len=5000, dtype=x4.dtype)
    out4 = jax.block_until_ready(
        positional_encoding_forward(x4, pe4, seed, p=dropout_p, training=False,
                                    target_block_bytes=4 * 1024))
    assert jnp.allclose(out4, x4 + pe4[:, :S4, :], atol=1e-6), "mismatch (ragged lanes)"

    # 5) Training-mode dropout uses the TPU hardware PRNG (no CPU lowering),
    #    so only exercise it on a real TPU backend.
    if jax.default_backend() == "tpu":
        out_tr = jax.block_until_ready(
            positional_encoding_forward(x, pe, seed, p=dropout_p, training=True))
        assert out_tr.shape == (B, S, D)
        assert bool(jnp.all(jnp.isfinite(out_tr)))
        scaled = ref / (1.0 - dropout_p)
        elem_ok = jnp.isclose(out_tr, scaled, rtol=1e-5, atol=1e-6) | (out_tr == 0.0)
        assert bool(jnp.all(elem_ok)), "dropout output not in {0, scaled(x+pe)}"
        drop_frac = float(jnp.mean((out_tr == 0.0).astype(jnp.float32)))
        assert 0.0 < drop_frac < 0.5, "dropout rate far from p"

    print("KERNEL_OK")
</pallas_src>

<mosaic_0001>
module attributes {stable_mosaic.version = 11 : i64} {
  func.func @_pe_kernel(%arg0: i32, %arg1: memref<1xi32, #tpu.memory_space<smem>>, %arg2: memref<2x256xf32, #tpu.memory_space<vmem>>, %arg3: memref<1x256xf32, #tpu.memory_space<vmem>>, %arg4: memref<2x256xf32, #tpu.memory_space<vmem>>) attributes {dimension_semantics = [#tpu.dimension_semantics<parallel>], iteration_bounds = array<i64: 1>, scalar_prefetch = 1 : i64, scratch_operands = 0 : i64, tpu.core_type = #tpu.core_type<tc>, window_params = [{transform_indices = @transform_0, window_bounds = array<i64: 2, 256>}, {transform_indices = @transform_1, window_bounds = array<i64: 1, 256>}, {transform_indices = @transform_2, window_bounds = array<i64: 2, 256>}]} {
    %c0 = arith.constant 0 : index
    %c0_0 = arith.constant 0 : index
    %0 = vector.load %arg2[%c0, %c0_0] : memref<2x256xf32, #tpu.memory_space<vmem>>, vector<2x256xf32>
    %c0_1 = arith.constant 0 : index
    %c0_2 = arith.constant 0 : index
    %1 = vector.load %arg3[%c0_1, %c0_2] : memref<1x256xf32, #tpu.memory_space<vmem>>, vector<1x256xf32>
    %2 = vector.broadcast %1 : vector<1x256xf32> to vector<2x256xf32>
    %3 = arith.addf %0, %2 : vector<2x256xf32>
    %c0_3 = arith.constant 0 : index
    %c0_4 = arith.constant 0 : index
    %4 = vector.load %arg4[%c0_3, %c0_4] : memref<2x256xf32, #tpu.memory_space<vmem>>, vector<2x256xf32>
    tpu.vector_store %arg4[%c0_3, %c0_4], %3 {strides = array<i32>} : memref<2x256xf32, #tpu.memory_space<vmem>>, vector<2x256xf32>,
    return
  }
  func.func @transform_0(%arg0: i32, %arg1: memref<1xi32, #tpu.memory_space<smem>>) -> (i32, i32) {
    %c0_i32 = arith.constant 0 : i32
    %c0_i32_0 = arith.constant 0 : i32
    return %c0_i32, %arg0 : i32, i32
  }
  func.func @transform_1(%arg0: i32, %arg1: memref<1xi32, #tpu.memory_space<smem>>) -> (i32, i32) {
    %c0_i32 = arith.constant 0 : i32
    %c0_i32_0 = arith.constant 0 : i32
    return %c0_i32, %arg0 : i32, i32
  }
  func.func @transform_2(%arg0: i32, %arg1: memref<1xi32, #tpu.memory_space<smem>>) -> (i32, i32) {
    %c0_i32 = arith.constant 0 : i32
    %c0_i32_0 = arith.constant 0 : i32
    return %c0_i32, %arg0 : i32, i32
  }
}

</mosaic_0001>

<llo_original>
// kernel: tpu_custom_call.1
$region0: #{tpu_custom_call.1}
  #allocation0 [shape = 'u32[]', space=smem, size = 0x4, offset = 0x4, fixed_abs, tag = 'smem constant byte address 0x4 - core index']
  #allocation1 [shape = 'u32[144,128]{1,0:T(1,128)}', space=vmem, size = 0x12000, scoped, tag = 'internal scratch']
  #allocation2 [shape = 's32[1]{0}', space=sflag, size = 0x4, scoped, tag = 'scoped memory for tpu_custom_call.1']
  #allocation3 [shape = 's32[1]{0:T(128)S(6)}', space=smem, size = 0x200, scoped, tag = 'prefetched SMEM operand 0']
  %s0 = inlined_call_operand.<no memory space> [shape: s32[1], index: 0, kind: input, shape index: {}]
  %s1 = inlined_call_operand.hbm [shape: f32[2,256], index: 1, kind: input, shape index: {}]
  %s2 = inlined_call_operand.vmem [shape: f32[1,256], index: 2, kind: input, shape index: {}]
  %s3 = inlined_call_operand.hbm [shape: f32[2,256], index: 3, kind: output, shape index: {}]
  %s4 = sld [smem:[#allocation0]]
  $region22: #{tpu_custom_call.1} parent=0
    _
  %s6 = ssub.s32 1, %s4
  %s7 = scalar_select 0, %s6, %s4
  %8 = sst [smem:[#allocation3]] %s0
  $region1: #{tpu_custom_call.1} parent=0
    #allocation4 [shape = 'u8[2048]{0}', space=vmem, size = 0x800, scoped, tag = 'input window, operand 1, single buffered']
    #allocation5 [shape = 's32[1]{0}', space=sflag, size = 0x4, scoped, tag = 'scoped memory for tpu_custom_call.1']
    #allocation6 [shape = 's32[1]{0}', space=sflag, size = 0x4, scoped, tag = 'scoped memory for tpu_custom_call.1']
    #allocation7 [shape = 'u8[2048]{0}', space=vmem, size = 0x800, scoped, tag = 'output window, operand 0, single buffered']
    %9 = vsyncpa [#allocation5], 0
    %10 = vsyncpa [#allocation6], 0
    // Predicated region
    $region2: #{tpu_custom_call.1} parent=1 // pred_check
      _
    $region3: #{tpu_custom_call.1} parent=1 // pred_check_branch
      %12 = sbr.rel (0) target = $region5
    $region4: #{tpu_custom_call.1} parent=1 // pred_region
      %s14 = ssub.s32 64, 64
      %15 = vsyncadd [#allocation5], %s14
      %s17 = sshll.u32 [#allocation4], 4
      %s18 = int_to_ptr.vmem [resolvable:$true] %s17
      %20 = dma.hbm_to_vmem [thread:$0]  %s1, 64, %s18, [#allocation5]
    $region5: #{tpu_custom_call.1} parent=1 // pred_fallthru
      _
    // Predicated region
    $region6: #{tpu_custom_call.1} parent=1 // pred_check
      _
    $region7: #{tpu_custom_call.1} parent=1 // pred_check_branch
      %22 = sbr.rel (0) target = $region9
    $region8: #{tpu_custom_call.1} parent=1 // pred_region
      _
    $region9: #{tpu_custom_call.1} parent=1 // pred_fallthru
      _
    // Predicated region
    $region10: #{tpu_custom_call.1} parent=1 // pred_check
      _
    $region11: #{tpu_custom_call.1} parent=1 // pred_check_branch
      %24 = sbr.rel (0) target = $region13
    $region12: #{tpu_custom_call.1} parent=1 // pred_region
      %25 = dma.done [#allocation5], 64
    $region13: #{tpu_custom_call.1} parent=1 // pred_fallthru
      _
    %v26 = vld [vmem:[#allocation4] sm:$0xf]
    %v27 = vld [vmem:[%s2] sm:$0x3]
    %v29 = vlaneseq
    %v30 = vshrl.u32 %v29, 7
    %v31 = vsub.s32 0, %v30
    %v32 = vrot.slane %v27, %v31
    %v33 = vlaneseq
    %v34 = vshrl.u32 %v33, 7
    %v35 = vsub.s32 1, %v34
    %v36 = vrot.slane %v27, %v35
    %v37 = vcombine.low %v32, %v36
    %v39 = vunpack.c.l.s4 1983009808
    %v40 = vunpack.c.0.s8 %v39
    %v41 = vlaneseq
    %v42 = vshrl.u32 %v41, 7
    %v43 = vsub.s32 %v40, %v42
    %v44 = vrot.slane %v37, %v43
    %v46 = vadd.f32 %v26, %v44
    %47 = vst [vmem:[#allocation7] sm:$0xf] %v46
    // Predicated region
    $region14: #{tpu_custom_call.1} parent=1 // pred_check
      _
    $region15: #{tpu_custom_call.1} parent=1 // pred_check_branch
      %49 = sbr.rel (0) target = $region17
    $region16: #{tpu_custom_call.1} parent=1 // pred_region
      %s51 = ssub.s32 64, 64
      %52 = vsyncadd [#allocation6], %s51
      %s54 = sshll.u32 [#allocation7], 4
      %s55 = int_to_ptr.vmem [resolvable:$true] %s54
      %57 = dma.vmem_to_hbm [thread:$0]  %s55, 64, %s3, [#allocation6]
    $region17: #{tpu_custom_call.1} parent=1 // pred_fallthru
      _
    // Predicated region
    $region18: #{tpu_custom_call.1} parent=1 // pred_check
      _
    $region19: #{tpu_custom_call.1} parent=1 // pred_check_branch
      %59 = sbr.rel (0) target = $region21
    $region20: #{tpu_custom_call.1} parent=1 // pred_region
      %60 = dma.done [#allocation6], 64
    $region21: #{tpu_custom_call.1} parent=1 // pred_fallthru
      _
    %61 = vsyncpa [#allocation5], 1
    %62 = vsyncpa [#allocation6], 1

</llo_original>
